<compile_context>
chip_gen: v5e
topology: v5e:2x2
jax: 0.10.0
libtpu: 0.0.40
codegen_flags: <defaults>
</compile_context>

<pallas_src>
import functools

import jax
import jax.numpy as jnp
from jax.experimental import pallas as pl
from jax.experimental.pallas import tpu as pltpu

_LANE = 128          # lane width (last-dim tile)
_SUBLANE_F32 = 8     # f32 sublane tile
_SUBLANE_BF16 = 16   # bf16 sublane tile


def _round_up(v, m):
    return (v + m - 1) // m * m


# --------------------------------------------------------------------------
# Kernel
# --------------------------------------------------------------------------
def _decoder_kernel(num_layers, hidden_p, out_p, x_ref, *refs):
    """refs = (W1, ..., W_{num_layers}, W_mu, biases, out_ref)."""
    out_ref = refs[-1]
    b_ref = refs[-2]                      # (num_layers + 1, max_out_pad) f32
    w_refs = refs[:-2]                    # bf16 (in_p, out_p) weights

    h = x_ref[...]                        # (TB, latent_p) bf16 (MXU dtype already)
    for i in range(num_layers):
        acc = jnp.dot(h, w_refs[i][...], preferred_element_type=jnp.float32)
        bias = b_ref[i:i + 1, :hidden_p]  # (1, hidden_p) f32, static slice
        # f32 bias + ReLU (no bf16 VPU path on v5e), then cast the activation
        # to bf16 right away: identical numerics to casting at the next dot
        # input but halves the live activation footprint between layers.
        h = jnp.maximum(acc + bias, 0.0).astype(jnp.bfloat16)

    mu = jnp.dot(h, w_refs[num_layers][...], preferred_element_type=jnp.float32)
    mu = mu + b_ref[num_layers:num_layers + 1, :out_p]
    out_ref[...] = jnp.tanh(mu)           # lane-dense f32 store (out_p % 128 == 0)


# --------------------------------------------------------------------------
# Wrapper
# --------------------------------------------------------------------------
def _pick_batch_tile(B, block_b):
    """Largest batch tile (multiple of 8, <= block_b) with small padding, and
    >= 2 grid steps whenever possible so v7x can use both TensorCores."""
    B_p8 = _round_up(max(B, _SUBLANE_F32), _SUBLANE_F32)
    if B_p8 < 2 * _SUBLANE_F32:
        return B_p8, B_p8                 # single tiny tile (grid = 1)
    cap = min(block_b, _round_up(pl.cdiv(B_p8, 2), _SUBLANE_F32))
    allowed_pad = max(B // 8, 2 * _SUBLANE_F32)
    tb = _SUBLANE_F32
    for cand in (512, 256, 128, 64, 32, 16, 8):
        if cand > cap:
            continue
        if _round_up(B_p8, cand) - B <= allowed_pad:
            tb = cand
            break
    return tb, _round_up(B_p8, tb)


def decoder_forward(x, weights, biases, *, num_layers, input_dims, block_b=512):
    """x: (B, latent_dims) float.  weights: list of padded bf16 (in_p, out_p)
    arrays.  biases: (num_layers + 1, max_out_pad) f32 (rows = per-layer bias)."""
    B, latent = x.shape
    latent_p = weights[0].shape[0]
    hidden_p = weights[0].shape[1]
    out_p = weights[-1].shape[1]

    TB, B_p = _pick_batch_tile(B, block_b)

    # Pad directly into a bf16 buffer (no padded f32 copy of x in HBM).
    x_bf16 = x.astype(jnp.bfloat16)
    if B_p == B and latent_p == latent:
        x_p = x_bf16
    else:
        x_p = jnp.zeros((B_p, latent_p), jnp.bfloat16).at[:B, :latent].set(x_bf16)

    operands = [x_p] + list(weights) + [biases]

    # Scoped-VMEM limit sized from the resident footprint (weights + biases +
    # double-buffered x/out tiles), with headroom; clamped for v7x's 64 MiB.
    resident = sum(int(w.size) * w.dtype.itemsize for w in weights)
    resident += int(biases.size) * biases.dtype.itemsize
    resident += 2 * (TB * latent_p * 2 + TB * out_p * 4)
    vmem_limit = min(max(2 * resident + (2 << 20), 16 << 20), 64 << 20)

    kernel = functools.partial(_decoder_kernel, num_layers, hidden_p, out_p)
    grid = (B_p // TB,)
    out_shape = jax.ShapeDtypeStruct((B_p, out_p), jnp.float32)
    cparams = pltpu.CompilerParams(dimension_semantics=("parallel",),
                                   vmem_limit_bytes=vmem_limit)

    def build(single_buffer_consts):
        def const_spec(shape):
            nd = len(shape)
            idx = lambda i, _nd=nd: (0,) * _nd    # constant -> stays VMEM-resident
            if single_buffer_consts:
                # Constant blocks never change across grid steps: single-buffer
                # them instead of the default double buffer (halves weight VMEM).
                return pl.BlockSpec(shape, idx, pipeline_mode=pl.Buffered(1))
            return pl.BlockSpec(shape, idx)

        in_specs = [pl.BlockSpec((TB, latent_p), lambda i: (i, 0))]
        in_specs += [const_spec(w.shape) for w in weights]
        in_specs.append(const_spec(biases.shape))
        return pl.pallas_call(
            kernel,
            out_shape=out_shape,
            grid=grid,
            in_specs=in_specs,
            out_specs=pl.BlockSpec((TB, out_p), lambda i: (i, 0)),
            compiler_params=cparams,
        )

    try:
        out_padded = jax.block_until_ready(build(True)(*operands))
    except Exception:
        # Fallback for jax versions without BlockSpec(pipeline_mode=...) support.
        out_padded = build(False)(*operands)

    return out_padded[:B, :input_dims]


# --------------------------------------------------------------------------
# Params
# --------------------------------------------------------------------------
def init_decoder_params(key, input_dims, hidden_dims, latent_dims, num_layers):
    """Logical (unpadded) f32 params mirroring nn.Linear init.

    Weights already transposed to (in_dim, out_dim); biases as (1, out_dim).
    """
    params = []
    dims_in = [latent_dims] + [hidden_dims] * (num_layers - 1)
    dims_out = [hidden_dims] * num_layers
    for din, dout in zip(dims_in, dims_out):
        kw, kb, key = jax.random.split(key, 3)
        bound = 1.0 / jnp.sqrt(din)
        w = jax.random.uniform(kw, (din, dout), jnp.float32, -bound, bound)
        b = jax.random.uniform(kb, (1, dout), jnp.float32, -bound, bound)
        params += [w, b]
    kw, kb, key = jax.random.split(key, 3)
    bound = 1.0 / jnp.sqrt(hidden_dims)
    w_mu = jax.random.uniform(kw, (hidden_dims, input_dims), jnp.float32,
                              -bound, bound)
    b_mu = jax.random.uniform(kb, (1, input_dims), jnp.float32, -bound, bound)
    params += [w_mu, b_mu]
    # sigma exists in __init__ but is unused in forward; kept for completeness.
    sigma = jnp.ones((1,), jnp.float32)
    return params, sigma


def pack_params(params):
    """Pad features to MXU-friendly sizes, cast weights to bf16, fuse biases.

    Layer-1 K (latent) is padded only to a multiple of 16 (bf16 sublane); all
    hidden/output N dims are padded to multiples of 128.  (On v6e, choosing
    hidden/output widths that are multiples of 256 uses the full 256x256 MXU.)
    Returns (weights_list_bf16, biases_f32[(num_layers+1), max_out_pad]).
    """
    n = len(params) // 2
    weights, raw_biases = [], []
    for i in range(n):
        w, b = params[2 * i], params[2 * i + 1]
        din, dout = w.shape
        din_p = _round_up(din, _SUBLANE_BF16 if i == 0 else _LANE)
        dout_p = _round_up(dout, _LANE)
        w_p = (jnp.zeros((din_p, dout_p), jnp.float32)
               .at[:din, :dout].set(w).astype(jnp.bfloat16))
        weights.append(w_p)
        raw_biases.append((b, dout_p))
    max_pad = max(dp for _, dp in raw_biases)
    biases = jnp.zeros((n, max_pad), jnp.float32)
    for i, (b, _) in enumerate(raw_biases):
        biases = biases.at[i, :b.shape[1]].set(b[0])
    return weights, biases


# --------------------------------------------------------------------------
# References
# --------------------------------------------------------------------------
def reference_forward_packed(x, weights, biases, *, num_layers, input_dims):
    """Mirrors kernel numerics: bf16 activations/weights, f32 accumulate."""
    latent_p = weights[0].shape[0]
    hidden_p = weights[0].shape[1]
    out_p = weights[-1].shape[1]
    h = jnp.zeros((x.shape[0], latent_p), jnp.bfloat16).at[:, :x.shape[1]].set(
        x.astype(jnp.bfloat16))
    for i in range(num_layers):
        acc = jnp.dot(h, weights[i], preferred_element_type=jnp.float32)
        h = jnp.maximum(acc + biases[i:i + 1, :hidden_p], 0.0).astype(jnp.bfloat16)
    mu = jnp.dot(h, weights[num_layers], preferred_element_type=jnp.float32)
    mu = mu + biases[num_layers:num_layers + 1, :out_p]
    return jnp.tanh(mu)[:, :input_dims]


def reference_forward_f32(x, params, *, num_layers):
    """Pure f32 reference with the original (unpadded) parameters."""
    h = x
    for i in range(num_layers):
        h = jnp.maximum(h @ params[2 * i] + params[2 * i + 1], 0.0)
    return jnp.tanh(h @ params[-2] + params[-1])


# --------------------------------------------------------------------------
if __name__ == "__main__":
    batch = 8
    latent_dims = 8
    hidden_dims = 32
    input_dims = 16
    num_layers = 2

    key = jax.random.PRNGKey(0)
    kx, kp = jax.random.split(key)
    x = jax.random.normal(kx, (batch, latent_dims), jnp.float32)
    params, _sigma = init_decoder_params(
        kp, input_dims, hidden_dims, latent_dims, num_layers)
    weights, biases = pack_params(params)

    mu = decoder_forward(x, weights, biases, num_layers=num_layers,
                         input_dims=input_dims)
    mu = jax.block_until_ready(mu)
    assert mu.shape == (batch, input_dims), mu.shape

    # Exact-numerics check (same bf16 weights / bf16 activations, f32 accum).
    ref_packed = reference_forward_packed(
        x, weights, biases, num_layers=num_layers, input_dims=input_dims)
    assert jnp.allclose(mu, ref_packed, atol=1e-4, rtol=1e-4), \
        "mismatch vs bf16-matched reference"

    # Semantics check vs the pure-f32 PyTorch-equivalent reference
    # (loose tolerance only because weights/activations feed the MXU in bf16).
    ref_f32 = reference_forward_f32(x, params, num_layers=num_layers)
    assert jnp.allclose(mu, ref_f32, atol=3e-2, rtol=3e-2), \
        "mismatch vs f32 reference"

    print("KERNEL_OK")
</pallas_src>

<mosaic_0001>
module attributes {stable_mosaic.version = 11 : i64} {
  func.func @_decoder_kernel(%arg0: i32, %arg1: memref<8x16xbf16, #tpu.memory_space<vmem>>, %arg2: memref<16x128xbf16, #tpu.memory_space<vmem>>, %arg3: memref<128x128xbf16, #tpu.memory_space<vmem>>, %arg4: memref<128x128xbf16, #tpu.memory_space<vmem>>, %arg5: memref<3x128xf32, #tpu.memory_space<vmem>>, %arg6: memref<8x128xf32, #tpu.memory_space<vmem>>) attributes {dimension_semantics = [#tpu.dimension_semantics<parallel>], iteration_bounds = array<i64: 1>, scalar_prefetch = 0 : i64, scratch_operands = 0 : i64, tpu.core_type = #tpu.core_type<tc>, window_params = [{transform_indices = @transform_0, window_bounds = array<i64: 8, 16>}, {pipeline_mode = #tpu.pipeline_mode<synchronous>, transform_indices = @transform_1, window_bounds = array<i64: 16, 128>}, {pipeline_mode = #tpu.pipeline_mode<synchronous>, transform_indices = @transform_2, window_bounds = array<i64: 128, 128>}, {pipeline_mode = #tpu.pipeline_mode<synchronous>, transform_indices = @transform_3, window_bounds = array<i64: 128, 128>}, {pipeline_mode = #tpu.pipeline_mode<synchronous>, transform_indices = @transform_4, window_bounds = array<i64: 3, 128>}, {transform_indices = @transform_5, window_bounds = array<i64: 8, 128>}]} {
    %c0 = arith.constant 0 : index
    %c0_0 = arith.constant 0 : index
    %0 = vector.load %arg1[%c0, %c0_0] : memref<8x16xbf16, #tpu.memory_space<vmem>>, vector<8x16xbf16>
    %c0_1 = arith.constant 0 : index
    %c0_2 = arith.constant 0 : index
    %1 = vector.load %arg2[%c0_1, %c0_2] : memref<16x128xbf16, #tpu.memory_space<vmem>>, vector<16x128xbf16>
    %cst = arith.constant dense<0.000000e+00> : vector<8x128xf32>
    %2 = tpu.matmul %0, %1, %cst {dimension_numbers = #tpu.dot_dimension_numbers<[1], [0], [0], [1], [0, 0, 1, 1], [], []>} : vector<8x16xbf16>, vector<16x128xbf16>, vector<8x128xf32> -> vector<8x128xf32>
    %c0_3 = arith.constant 0 : index
    %c0_4 = arith.constant 0 : index
    %3 = vector.load %arg5[%c0_3, %c0_4] : memref<3x128xf32, #tpu.memory_space<vmem>>, vector<1x128xf32>
    %4 = vector.broadcast %3 : vector<1x128xf32> to vector<8x128xf32>
    %5 = arith.addf %2, %4 : vector<8x128xf32>
    %cst_5 = arith.constant 0.000000e+00 : f32
    %6 = vector.broadcast %cst_5 : f32 to vector<8x128xf32>
    %7 = arith.maximumf %5, %6 : vector<8x128xf32>
    %8 = arith.truncf %7 : vector<8x128xf32> to vector<8x128xbf16>
    %c0_6 = arith.constant 0 : index
    %c0_7 = arith.constant 0 : index
    %9 = vector.load %arg3[%c0_6, %c0_7] : memref<128x128xbf16, #tpu.memory_space<vmem>>, vector<128x128xbf16>
    %cst_8 = arith.constant dense<0.000000e+00> : vector<8x128xf32>
    %10 = tpu.matmul %8, %9, %cst_8 {dimension_numbers = #tpu.dot_dimension_numbers<[1], [0], [0], [1], [0, 0, 1, 1], [], []>} : vector<8x128xbf16>, vector<128x128xbf16>, vector<8x128xf32> -> vector<8x128xf32>
    %c1 = arith.constant 1 : index
    %c0_9 = arith.constant 0 : index
    %11 = vector.load %arg5[%c1, %c0_9] : memref<3x128xf32, #tpu.memory_space<vmem>>, vector<1x128xf32>
    %12 = vector.broadcast %11 : vector<1x128xf32> to vector<8x128xf32>
    %13 = arith.addf %10, %12 : vector<8x128xf32>
    %cst_10 = arith.constant 0.000000e+00 : f32
    %14 = vector.broadcast %cst_10 : f32 to vector<8x128xf32>
    %15 = arith.maximumf %13, %14 : vector<8x128xf32>
    %16 = arith.truncf %15 : vector<8x128xf32> to vector<8x128xbf16>
    %c0_11 = arith.constant 0 : index
    %c0_12 = arith.constant 0 : index
    %17 = vector.load %arg4[%c0_11, %c0_12] : memref<128x128xbf16, #tpu.memory_space<vmem>>, vector<128x128xbf16>
    %cst_13 = arith.constant dense<0.000000e+00> : vector<8x128xf32>
    %18 = tpu.matmul %16, %17, %cst_13 {dimension_numbers = #tpu.dot_dimension_numbers<[1], [0], [0], [1], [0, 0, 1, 1], [], []>} : vector<8x128xbf16>, vector<128x128xbf16>, vector<8x128xf32> -> vector<8x128xf32>
    %c2 = arith.constant 2 : index
    %c0_14 = arith.constant 0 : index
    %19 = vector.load %arg5[%c2, %c0_14] : memref<3x128xf32, #tpu.memory_space<vmem>>, vector<1x128xf32>
    %20 = vector.broadcast %19 : vector<1x128xf32> to vector<8x128xf32>
    %21 = arith.addf %18, %20 : vector<8x128xf32>
    %22 = math.tanh %21 : vector<8x128xf32>
    %c0_15 = arith.constant 0 : index
    %c0_16 = arith.constant 0 : index
    %23 = vector.load %arg6[%c0_15, %c0_16] : memref<8x128xf32, #tpu.memory_space<vmem>>, vector<8x128xf32>
    tpu.vector_store %arg6[%c0_15, %c0_16], %22 {strides = array<i32>} : memref<8x128xf32, #tpu.memory_space<vmem>>, vector<8x128xf32>,
    return
  }
  func.func @transform_0(%arg0: i32) -> (i32, i32) {
    %c0_i32 = arith.constant 0 : i32
    %c0_i32_0 = arith.constant 0 : i32
    return %arg0, %c0_i32 : i32, i32
  }
  func.func @transform_1(%arg0: i32) -> (i32, i32) {
    %c0_i32 = arith.constant 0 : i32
    %c0_i32_0 = arith.constant 0 : i32
    %c0_i32_1 = arith.constant 0 : i32
    return %c0_i32, %c0_i32_0 : i32, i32
  }
  func.func @transform_2(%arg0: i32) -> (i32, i32) {
    %c0_i32 = arith.constant 0 : i32
    %c0_i32_0 = arith.constant 0 : i32
    %c0_i32_1 = arith.constant 0 : i32
    return %c0_i32, %c0_i32_0 : i32, i32
  }
  func.func @transform_3(%arg0: i32) -> (i32, i32) {
    %c0_i32 = arith.constant 0 : i32
    %c0_i32_0 = arith.constant 0 : i32
    %c0_i32_1 = arith.constant 0 : i32
    return %c0_i32, %c0_i32_0 : i32, i32
  }
  func.func @transform_4(%arg0: i32) -> (i32, i32) {
    %c0_i32 = arith.constant 0 : i32
    %c0_i32_0 = arith.constant 0 : i32
    %c0_i32_1 = arith.constant 0 : i32
    return %c0_i32, %c0_i32_0 : i32, i32
  }
  func.func @transform_5(%arg0: i32) -> (i32, i32) {
    %c0_i32 = arith.constant 0 : i32
    %c0_i32_0 = arith.constant 0 : i32
    return %arg0, %c0_i32 : i32, i32
  }
}

module attributes {stable_mosaic.version = 11 : i64} {
  func.func @_decoder_kernel(%arg0: i32, %arg1: memref<8x16xbf16, #tpu.memory_space<vmem>>, %arg2: memref<16x128xbf16, #tpu.memory_space<vmem>>, %arg3: memref<128x128xbf16, #tpu.memory_space<vmem>>, %arg4: memref<128x128xbf16, #tpu.memory_space<vmem>>, %arg5: memref<3x128xf32, #tpu.memory_space<vmem>>, %arg6: memref<8x128xf32, #tpu.memory_space<vmem>>) attributes {dimension_semantics = [#tpu.dimension_semantics<parallel>], iteration_bounds = array<i64: 1>, scalar_prefetch = 0 : i64, scratch_operands = 0 : i64, tpu.core_type = #tpu.core_type<tc>, window_params = [{transform_indices = @transform_0, window_bounds = array<i64: 8, 16>}, {pipeline_mode = #tpu.pipeline_mode<synchronous>, transform_indices = @transform_1, window_bounds = array<i64: 16, 128>}, {pipeline_mode = #tpu.pipeline_mode<synchronous>, transform_indices = @transform_2, window_bounds = array<i64: 128, 128>}, {pipeline_mode = #tpu.pipeline_mode<synchronous>, transform_indices = @transform_3, window_bounds = array<i64: 128, 128>}, {pipeline_mode = #tpu.pipeline_mode<synchronous>, transform_indices = @transform_4, window_bounds = array<i64: 3, 128>}, {transform_indices = @transform_5, window_bounds = array<i64: 8, 128>}]} {
    %c0 = arith.constant 0 : index
    %c0_0 = arith.constant 0 : index
    %0 = vector.load %arg1[%c0, %c0_0] : memref<8x16xbf16, #tpu.memory_space<vmem>>, vector<8x16xbf16>
    %c0_1 = arith.constant 0 : index
    %c0_2 = arith.constant 0 : index
    %1 = vector.load %arg2[%c0_1, %c0_2] : memref<16x128xbf16, #tpu.memory_space<vmem>>, vector<16x128xbf16>
    %cst = arith.constant dense<0.000000e+00> : vector<8x128xf32>
    %2 = tpu.matmul %0, %1, %cst {dimension_numbers = #tpu.dot_dimension_numbers<[1], [0], [0], [1], [0, 0, 1, 1], [], []>} : vector<8x16xbf16>, vector<16x128xbf16>, vector<8x128xf32> -> vector<8x128xf32>
    %c0_3 = arith.constant 0 : index
    %c0_4 = arith.constant 0 : index
    %3 = vector.load %arg5[%c0_3, %c0_4] : memref<3x128xf32, #tpu.memory_space<vmem>>, vector<1x128xf32>
    %4 = vector.broadcast %3 : vector<1x128xf32> to vector<8x128xf32>
    %5 = arith.addf %2, %4 : vector<8x128xf32>
    %cst_5 = arith.constant 0.000000e+00 : f32
    %6 = vector.broadcast %cst_5 : f32 to vector<8x128xf32>
    %7 = arith.maximumf %5, %6 : vector<8x128xf32>
    %8 = arith.truncf %7 : vector<8x128xf32> to vector<8x128xbf16>
    %c0_6 = arith.constant 0 : index
    %c0_7 = arith.constant 0 : index
    %9 = vector.load %arg3[%c0_6, %c0_7] : memref<128x128xbf16, #tpu.memory_space<vmem>>, vector<128x128xbf16>
    %cst_8 = arith.constant dense<0.000000e+00> : vector<8x128xf32>
    %10 = tpu.matmul %8, %9, %cst_8 {dimension_numbers = #tpu.dot_dimension_numbers<[1], [0], [0], [1], [0, 0, 1, 1], [], []>} : vector<8x128xbf16>, vector<128x128xbf16>, vector<8x128xf32> -> vector<8x128xf32>
    %c1 = arith.constant 1 : index
    %c0_9 = arith.constant 0 : index
    %11 = vector.load %arg5[%c1, %c0_9] : memref<3x128xf32, #tpu.memory_space<vmem>>, vector<1x128xf32>
    %12 = vector.broadcast %11 : vector<1x128xf32> to vector<8x128xf32>
    %13 = arith.addf %10, %12 : vector<8x128xf32>
    %cst_10 = arith.constant 0.000000e+00 : f32
    %14 = vector.broadcast %cst_10 : f32 to vector<8x128xf32>
    %15 = arith.maximumf %13, %14 : vector<8x128xf32>
    %16 = arith.truncf %15 : vector<8x128xf32> to vector<8x128xbf16>
    %c0_11 = arith.constant 0 : index
    %c0_12 = arith.constant 0 : index
    %17 = vector.load %arg4[%c0_11, %c0_12] : memref<128x128xbf16, #tpu.memory_space<vmem>>, vector<128x128xbf16>
    %cst_13 = arith.constant dense<0.000000e+00> : vector<8x128xf32>
    %18 = tpu.matmul %16, %17, %cst_13 {dimension_numbers = #tpu.dot_dimension_numbers<[1], [0], [0], [1], [0, 0, 1, 1], [], []>} : vector<8x128xbf16>, vector<128x128xbf16>, vector<8x128xf32> -> vector<8x128xf32>
    %c2 = arith.constant 2 : index
    %c0_14 = arith.constant 0 : index
    %19 = vector.load %arg5[%c2, %c0_14] : memref<3x128xf32, #tpu.memory_space<vmem>>, vector<1x128xf32>
    %20 = vector.broadcast %19 : vector<1x128xf32> to vector<8x128xf32>
    %21 = arith.addf %18, %20 : vector<8x128xf32>
    %22 = math.tanh %21 : vector<8x128xf32>
    %c0_15 = arith.constant 0 : index
    %c0_16 = arith.constant 0 : index
    %23 = vector.load %arg6[%c0_15, %c0_16] : memref<8x128xf32, #tpu.memory_space<vmem>>, vector<8x128xf32>
    tpu.vector_store %arg6[%c0_15, %c0_16], %22 {strides = array<i32>} : memref<8x128xf32, #tpu.memory_space<vmem>>, vector<8x128xf32>,
    return
  }
  func.func @transform_0(%arg0: i32) -> (i32, i32) {
    %c0_i32 = arith.constant 0 : i32
    %c0_i32_0 = arith.constant 0 : i32
    return %arg0, %c0_i32 : i32, i32
  }
  func.func @transform_1(%arg0: i32) -> (i32, i32) {
    %c0_i32 = arith.constant 0 : i32
    %c0_i32_0 = arith.constant 0 : i32
    %c0_i32_1 = arith.constant 0 : i32
    return %c0_i32, %c0_i32_0 : i32, i32
  }
  func.func @transform_2(%arg0: i32) -> (i32, i32) {
    %c0_i32 = arith.constant 0 : i32
    %c0_i32_0 = arith.constant 0 : i32
    %c0_i32_1 = arith.constant 0 : i32
    return %c0_i32, %c0_i32_0 : i32, i32
  }
  func.func @transform_3(%arg0: i32) -> (i32, i32) {
    %c0_i32 = arith.constant 0 : i32
    %c0_i32_0 = arith.constant 0 : i32
    %c0_i32_1 = arith.constant 0 : i32
    return %c0_i32, %c0_i32_0 : i32, i32
  }
  func.func @transform_4(%arg0: i32) -> (i32, i32) {
    %c0_i32 = arith.constant 0 : i32
    %c0_i32_0 = arith.constant 0 : i32
    %c0_i32_1 = arith.constant 0 : i32
    return %c0_i32, %c0_i32_0 : i32, i32
  }
  func.func @transform_5(%arg0: i32) -> (i32, i32) {
    %c0_i32 = arith.constant 0 : i32
    %c0_i32_0 = arith.constant 0 : i32
    return %arg0, %c0_i32 : i32, i32
  }
}

</mosaic_0001>

<llo_original>
// kernel: tpu_custom_call.1
$region0: #{tpu_custom_call.1}
  #allocation0 [shape = 'u32[]', space=smem, size = 0x4, offset = 0x4, fixed_abs, tag = 'smem constant byte address 0x4 - core index']
  #allocation1 [shape = 'u32[72,128]{1,0:T(1,128)}', space=vmem, size = 0x9000, scoped, tag = 'internal scratch']
  %s0 = inlined_call_operand.hbm [shape: bf16[8,16], index: 0, kind: input, shape index: {}]
  %s1 = inlined_call_operand.hbm [shape: bf16[16,128], index: 1, kind: input, shape index: {}]
  %s2 = inlined_call_operand.hbm [shape: bf16[128,128], index: 2, kind: input, shape index: {}]
  %s3 = inlined_call_operand.hbm [shape: bf16[128,128], index: 3, kind: input, shape index: {}]
  %s4 = inlined_call_operand.hbm [shape: f32[3,128], index: 4, kind: input, shape index: {}]
  %s5 = inlined_call_operand.hbm [shape: f32[8,128], index: 5, kind: output, shape index: {}]
  %s6 = sld [smem:[#allocation0]]
  $region50: #{tpu_custom_call.1} parent=0
    _
  %s8 = ssub.s32 1, %s6
  %s9 = scalar_select 0, %s8, %s6
  $region1: #{tpu_custom_call.1} parent=0
    #allocation2 [shape = 'u8[2048]{0}', space=vmem, size = 0x800, scoped, tag = 'input window, operand 0, single buffered']
    #allocation3 [shape = 's32[1]{0}', space=sflag, size = 0x4, scoped, tag = 'scoped memory for tpu_custom_call.1']
    #allocation4 [shape = 's32[1]{0}', space=sflag, size = 0x4, scoped, tag = 'scoped memory for tpu_custom_call.1']
    #allocation5 [shape = 'u8[4096]{0}', space=vmem, size = 0x1000, scoped, tag = 'input window, operand 1, single buffered']
    #allocation6 [shape = 's32[1]{0}', space=sflag, size = 0x4, scoped, tag = 'scoped memory for tpu_custom_call.1']
    #allocation7 [shape = 'u8[32768]{0}', space=vmem, size = 0x8000, scoped, tag = 'input window, operand 2, single buffered']
    #allocation8 [shape = 'u8[32768]{0}', space=vmem, size = 0x8000, scoped, tag = 'input window, operand 3, single buffered']
    #allocation9 [shape = 's32[1]{0}', space=sflag, size = 0x4, scoped, tag = 'scoped memory for tpu_custom_call.1']
    #allocation10 [shape = 'u8[2048]{0}', space=vmem, size = 0x800, scoped, tag = 'input window, operand 4, single buffered']
    #allocation11 [shape = 'u8[4096]{0}', space=vmem, size = 0x1000, scoped, tag = 'output window, operand 0, single buffered']
    %10 = vsyncpa [#allocation3], 0
    %11 = vsyncpa [#allocation6], 0
    %12 = vsyncpa [#allocation9], 0
    %13 = vsyncpa [#allocation4], 0
    // Predicated region
    $region2: #{tpu_custom_call.1} parent=1 // pred_check
      _
    $region3: #{tpu_custom_call.1} parent=1 // pred_check_branch
      %15 = sbr.rel (0) target = $region5
    $region4: #{tpu_custom_call.1} parent=1 // pred_region
      %17 = vsyncadd [#allocation3], 0
      %s19 = sshll.u32 %s0, 4
      %s20 = int_to_ptr.hbm [resolvable:$true] %s19
      %s21 = sshll.u32 [#allocation2], 4
      %s22 = int_to_ptr.vmem [resolvable:$true] %s21
      %24 = dma.hbm_to_vmem [thread:$0]  %s20, 64, %s22, [#allocation3]
    $region5: #{tpu_custom_call.1} parent=1 // pred_fallthru
      _
    // Predicated region
    $region6: #{tpu_custom_call.1} parent=1 // pred_check
      _
    $region7: #{tpu_custom_call.1} parent=1 // pred_check_branch
      %26 = sbr.rel (0) target = $region9
    $region8: #{tpu_custom_call.1} parent=1 // pred_region
      %28 = vsyncadd [#allocation6], 0
      %s29 = sshll.u32 %s1, 4
      %s30 = int_to_ptr.hbm [resolvable:$true] %s29
      %s31 = sshll.u32 [#allocation5], 4
      %s32 = int_to_ptr.vmem [resolvable:$true] %s31
      %37 = dma.hbm_to_vmem [thread:$0]  %s30, 128, %s32, [#allocation6], 64, 64, 4
    $region9: #{tpu_custom_call.1} parent=1 // pred_fallthru
      _
    // Predicated region
    $region10: #{tpu_custom_call.1} parent=1 // pred_check
      _
    $region11: #{tpu_custom_call.1} parent=1 // pred_check_branch
      %39 = sbr.rel (0) target = $region13
    $region12: #{tpu_custom_call.1} parent=1 // pred_region
      %41 = vsyncadd [#allocation6], 0
      %s42 = sshll.u32 %s2, 4
      %s43 = int_to_ptr.hbm [resolvable:$true] %s42
      %s44 = sshll.u32 [#allocation7], 4
      %s45 = int_to_ptr.vmem [resolvable:$true] %s44
      %50 = dma.hbm_to_vmem [thread:$0]  %s43, 1024, %s45, [#allocation6], 64, 64, 4
    $region13: #{tpu_custom_call.1} parent=1 // pred_fallthru
      _
    // Predicated region
    $region14: #{tpu_custom_call.1} parent=1 // pred_check
      _
    $region15: #{tpu_custom_call.1} parent=1 // pred_check_branch
      %52 = sbr.rel (0) target = $region17
    $region16: #{tpu_custom_call.1} parent=1 // pred_region
      %54 = vsyncadd [#allocation9], 0
      %s55 = sshll.u32 %s3, 4
      %s56 = int_to_ptr.hbm [resolvable:$true] %s55
      %s57 = sshll.u32 [#allocation8], 4
      %s58 = int_to_ptr.vmem [resolvable:$true] %s57
      %63 = dma.hbm_to_vmem [thread:$0]  %s56, 1024, %s58, [#allocation9], 64, 64, 4
    $region17: #{tpu_custom_call.1} parent=1 // pred_fallthru
      _
    // Predicated region
    $region18: #{tpu_custom_call.1} parent=1 // pred_check
      _
    $region19: #{tpu_custom_call.1} parent=1 // pred_check_branch
      %65 = sbr.rel (0) target = $region21
    $region20: #{tpu_custom_call.1} parent=1 // pred_region
      %67 = vsyncadd [#allocation9], 0
      %s69 = sshll.u32 %s4, 4
      %s70 = int_to_ptr.hbm [resolvable:$true] %s69
      %s71 = sshll.u32 [#allocation10], 4
      %s72 = int_to_ptr.vmem [resolvable:$true] %s71
      %74 = dma.hbm_to_vmem [thread:$0]  %s70, 64, %s72, [#allocation9]
    $region21: #{tpu_custom_call.1} parent=1 // pred_fallthru
      _
    // Predicated region
    $region22: #{tpu_custom_call.1} parent=1 // pred_check
      _
    $region23: #{tpu_custom_call.1} parent=1 // pred_check_branch
      %76 = sbr.rel (0) target = $region25
    $region24: #{tpu_custom_call.1} parent=1 // pred_region
      %78 = dma.done [#allocation3], 64
    $region25: #{tpu_custom_call.1} parent=1 // pred_fallthru
      _
    // Predicated region
    $region26: #{tpu_custom_call.1} parent=1 // pred_check
      _
    $region27: #{tpu_custom_call.1} parent=1 // pred_check_branch
      %80 = sbr.rel (0) target = $region29
    $region28: #{tpu_custom_call.1} parent=1 // pred_region
      %82 = dma.done [#allocation6], 128
    $region29: #{tpu_custom_call.1} parent=1 // pred_fallthru
      _
    // Predicated region
    $region30: #{tpu_custom_call.1} parent=1 // pred_check
      _
    $region31: #{tpu_custom_call.1} parent=1 // pred_check_branch
      %84 = sbr.rel (0) target = $region33
    $region32: #{tpu_custom_call.1} parent=1 // pred_region
      %86 = dma.done [#allocation6], 1024
    $region33: #{tpu_custom_call.1} parent=1 // pred_fallthru
      _
    // Predicated region
    $region34: #{tpu_custom_call.1} parent=1 // pred_check
      _
    $region35: #{tpu_custom_call.1} parent=1 // pred_check_branch
      %88 = sbr.rel (0) target = $region37
    $region36: #{tpu_custom_call.1} parent=1 // pred_region
      %90 = dma.done [#allocation9], 1024
    $region37: #{tpu_custom_call.1} parent=1 // pred_fallthru
      _
    // Predicated region
    $region38: #{tpu_custom_call.1} parent=1 // pred_check
      _
    $region39: #{tpu_custom_call.1} parent=1 // pred_check_branch
      %92 = sbr.rel (0) target = $region41
    $region40: #{tpu_custom_call.1} parent=1 // pred_region
      %94 = dma.done [#allocation9], 64
    $region41: #{tpu_custom_call.1} parent=1 // pred_fallthru
      _
    %v96 = vld [vmem:[#allocation2] sm:$0xf]
    %v97 = vld [vmem:[#allocation5] sm:$0xf]
    %v98 = vld [vmem:[#allocation5 + $0x4] sm:$0xf]
    %v99 = vld [vmem:[#allocation10] sm:$0x1]
    %v100 = vperm.slane %v99, 0
    %v103 = vunpack.c.l.b16 %v97
    %v104 = vunpack.c.l.b16 %v98
    %v105 = vpack.c.b16 %v104, %v103
    %vm107 = vcmask 130048
    %v109 = vsel %vm107, %v96, 0
    %111 = vmatpush.bf16.msra.mxu0 0
    %112 = vmatpush.bf16.msra.mxu0 0
    %113 = vmatpush.bf16.msra.mxu0 0
    %114 = vmatpush.bf16.msra.mxu0 0
    %115 = vmatpush.bf16.msra.mxu0 0
    %116 = vmatpush.bf16.msra.mxu0 0
    %117 = vmatpush.bf16.msra.mxu0 0
    %118 = vmatpush.bf16.msra.mxu0 %v105
    %119 = vmatmul.bf16.gmra.mxu0 %v109
    %v120 = vpop.f32.mrf.mxu0
    %v121 = vadd.f32 %v100, %v120
    %v122 = vpop.f32.mrf.mxu0
    %123 = vdwg.mxu0
    %v124 = vmax.f32 %v121, 0.0
    %v125 = vpack.c.bf16 %v124, %v124
    %v126 = vld [vmem:[#allocation7] sm:$0xf]
    %v127 = vld [vmem:[#allocation7 + $0x4] sm:$0xf]
    %v128 = vld [vmem:[#allocation7 + $0x8] sm:$0xf]
    %v129 = vld [vmem:[#allocation7 + $0xc] sm:$0xf]
    %v130 = vld [vmem:[#allocation7 + $0x10] sm:$0xf]
    %v131 = vld [vmem:[#allocation7 + $0x14] sm:$0xf]
    %v132 = vld [vmem:[#allocation7 + $0x18] sm:$0xf]
    %v133 = vld [vmem:[#allocation7 + $0x1c] sm:$0xf]
    %v134 = vld [vmem:[#allocation7 + $0x20] sm:$0xf]
    %v135 = vld [vmem:[#allocation7 + $0x24] sm:$0xf]
    %v136 = vld [vmem:[#allocation7 + $0x28] sm:$0xf]
    %v137 = vld [vmem:[#allocation7 + $0x2c] sm:$0xf]
    %v138 = vld [vmem:[#allocation7 + $0x30] sm:$0xf]
    %v139 = vld [vmem:[#allocation7 + $0x34] sm:$0xf]
    %v140 = vld [vmem:[#allocation7 + $0x38] sm:$0xf]
    %v141 = vld [vmem:[#allocation7 + $0x3c] sm:$0xf]
    %v142 = vld [vmem:[#allocation10 + $0x1] sm:$0x1]
    %v143 = vperm.slane %v142, 0
    %v160 = vunpack.c.l.b16 %v126
    %v161 = vunpack.c.l.b16 %v127
    %v162 = vunpack.c.l.b16 %v128
    %v163 = vunpack.c.l.b16 %v129
    %v164 = vunpack.c.l.b16 %v130
    %v165 = vunpack.c.l.b16 %v131
    %v166 = vunpack.c.l.b16 %v132
    %v167 = vunpack.c.l.b16 %v133
    %v168 = vunpack.c.l.b16 %v134
    %v169 = vunpack.c.l.b16 %v135
    %v170 = vunpack.c.l.b16 %v136
    %v171 = vunpack.c.l.b16 %v137
    %v172 = vunpack.c.l.b16 %v138
    %v173 = vunpack.c.l.b16 %v139
    %v174 = vunpack.c.l.b16 %v140
    %v175 = vunpack.c.l.b16 %v141
    %v176 = vpack.c.b16 %v161, %v160
    %v177 = vpack.c.b16 %v163, %v162
    %v178 = vpack.c.b16 %v165, %v164
    %v179 = vpack.c.b16 %v167, %v166
    %v180 = vpack.c.b16 %v169, %v168
    %v181 = vpack.c.b16 %v171, %v170
    %v182 = vpack.c.b16 %v173, %v172
    %v183 = vpack.c.b16 %v175, %v174
    %192 = vmatpush.bf16.msra.mxu0 %v183
    %193 = vmatpush.bf16.msra.mxu0 %v182
    %194 = vmatpush.bf16.msra.mxu0 %v181
    %195 = vmatpush.bf16.msra.mxu0 %v180
    %196 = vmatpush.bf16.msra.mxu0 %v179
    %197 = vmatpush.bf16.msra.mxu0 %v178
    %198 = vmatpush.bf16.msra.mxu0 %v177
    %199 = vmatpush.bf16.msra.mxu0 %v176
    %200 = vmatmul.bf16.gmra.mxu0 %v125
    %v201 = vpop.f32.mrf.mxu0
    %v202 = vadd.f32 %v143, %v201
    %v203 = vpop.f32.mrf.mxu0
    %204 = vdwg.mxu0
    %v205 = vmax.f32 %v202, 0.0
    %v206 = vpack.c.bf16 %v205, %v205
    %v207 = vld [vmem:[#allocation8] sm:$0xf]
    %v208 = vld [vmem:[#allocation8 + $0x4] sm:$0xf]
    %v209 = vld [vmem:[#allocation8 + $0x8] sm:$0xf]
    %v210 = vld [vmem:[#allocation8 + $0xc] sm:$0xf]
    %v211 = vld [vmem:[#allocation8 + $0x10] sm:$0xf]
    %v212 = vld [vmem:[#allocation8 + $0x14] sm:$0xf]
    %v213 = vld [vmem:[#allocation8 + $0x18] sm:$0xf]
    %v214 = vld [vmem:[#allocation8 + $0x1c] sm:$0xf]
    %v215 = vld [vmem:[#allocation8 + $0x20] sm:$0xf]
    %v216 = vld [vmem:[#allocation8 + $0x24] sm:$0xf]
    %v217 = vld [vmem:[#allocation8 + $0x28] sm:$0xf]
    %v218 = vld [vmem:[#allocation8 + $0x2c] sm:$0xf]
    %v219 = vld [vmem:[#allocation8 + $0x30] sm:$0xf]
    %v220 = vld [vmem:[#allocation8 + $0x34] sm:$0xf]
    %v221 = vld [vmem:[#allocation8 + $0x38] sm:$0xf]
    %v222 = vld [vmem:[#allocation8 + $0x3c] sm:$0xf]
    %v223 = vld [vmem:[#allocation10 + $0x2] sm:$0x1]
    %v224 = vperm.slane %v223, 0
    %v241 = vunpack.c.l.b16 %v207
    %v242 = vunpack.c.l.b16 %v208
    %v243 = vunpack.c.l.b16 %v209
    %v244 = vunpack.c.l.b16 %v210
    %v245 = vunpack.c.l.b16 %v211
    %v246 = vunpack.c.l.b16 %v212
    %v247 = vunpack.c.l.b16 %v213
    %v248 = vunpack.c.l.b16 %v214
    %v249 = vunpack.c.l.b16 %v215
    %v250 = vunpack.c.l.b16 %v216
    %v251 = vunpack.c.l.b16 %v217
    %v252 = vunpack.c.l.b16 %v218
    %v253 = vunpack.c.l.b16 %v219
    %v254 = vunpack.c.l.b16 %v220
    %v255 = vunpack.c.l.b16 %v221
    %v256 = vunpack.c.l.b16 %v222
    %v257 = vpack.c.b16 %v242, %v241
    %v258 = vpack.c.b16 %v244, %v243
    %v259 = vpack.c.b16 %v246, %v245
    %v260 = vpack.c.b16 %v248, %v247
    %v261 = vpack.c.b16 %v250, %v249
    %v262 = vpack.c.b16 %v252, %v251
    %v263 = vpack.c.b16 %v254, %v253
    %v264 = vpack.c.b16 %v256, %v255
    %273 = vmatpush.bf16.msra.mxu0 %v264
    %274 = vmatpush.bf16.msra.mxu0 %v263
    %275 = vmatpush.bf16.msra.mxu0 %v262
    %276 = vmatpush.bf16.msra.mxu0 %v261
    %277 = vmatpush.bf16.msra.mxu0 %v260
    %278 = vmatpush.bf16.msra.mxu0 %v259
    %279 = vmatpush.bf16.msra.mxu0 %v258
    %280 = vmatpush.bf16.msra.mxu0 %v257
    %281 = vmatmul.bf16.gmra.mxu0 %v206
    %v282 = vpop.f32.mrf.mxu0
    %v283 = vadd.f32 %v224, %v282
    %v284 = vpop.f32.mrf.mxu0
    %285 = vdwg.mxu0
    %v286 = vtanh.pop %v283
    %287 = vst [vmem:[#allocation11] sm:$0xff] %v286
    // Predicated region
    $region42: #{tpu_custom_call.1} parent=1 // pred_check
      _
    $region43: #{tpu_custom_call.1} parent=1 // pred_check_branch
      %289 = sbr.rel (0) target = $region45
    $region44: #{tpu_custom_call.1} parent=1 // pred_region
      %291 = vsyncadd [#allocation4], 0
      %s293 = sshll.u32 [#allocation11], 4
      %s294 = int_to_ptr.vmem [resolvable:$true] %s293
      %s295 = sshll.u32 %s5, 4
      %s296 = int_to_ptr.hbm [resolvable:$true] %s295
      %298 = dma.vmem_to_hbm [thread:$0]  %s294, 128, %s296, [#allocation4]
    $region45: #{tpu_custom_call.1} parent=1 // pred_fallthru
      _
    // Predicated region
    $region46: #{tpu_custom_call.1} parent=1 // pred_check
      _
    $region47: #{tpu_custom_call.1} parent=1 // pred_check_branch
      %300 = sbr.rel (0) target = $region49
    $region48: #{tpu_custom_call.1} parent=1 // pred_region
      %302 = dma.done [#allocation4], 128
    $region49: #{tpu_custom_call.1} parent=1 // pred_fallthru
      _
    %303 = vsyncpa [#allocation3], 1
    %304 = vsyncpa [#allocation6], 1
    %305 = vsyncpa [#allocation9], 1
    %306 = vsyncpa [#allocation4], 1

// kernel: tpu_custom_call.1
$region0: #{tpu_custom_call.1}
  #allocation0 [shape = 'u32[]', space=smem, size = 0x4, offset = 0x4, fixed_abs, tag = 'smem constant byte address 0x4 - core index']
  #allocation1 [shape = 'u32[72,128]{1,0:T(1,128)}', space=vmem, size = 0x9000, scoped, tag = 'internal scratch']
  %s0 = inlined_call_operand.hbm [shape: bf16[8,16], index: 0, kind: input, shape index: {}]
  %s1 = inlined_call_operand.hbm [shape: bf16[16,128], index: 1, kind: input, shape index: {}]
  %s2 = inlined_call_operand.hbm [shape: bf16[128,128], index: 2, kind: input, shape index: {}]
  %s3 = inlined_call_operand.hbm [shape: bf16[128,128], index: 3, kind: input, shape index: {}]
  %s4 = inlined_call_operand.hbm [shape: f32[3,128], index: 4, kind: input, shape index: {}]
  %s5 = inlined_call_operand.hbm [shape: f32[8,128], index: 5, kind: output, shape index: {}]
  %s6 = sld [smem:[#allocation0]]
  $region50: #{tpu_custom_call.1} parent=0
    _
  %s8 = ssub.s32 1, %s6
  %s9 = scalar_select 0, %s8, %s6
  $region1: #{tpu_custom_call.1} parent=0
    #allocation2 [shape = 'u8[2048]{0}', space=vmem, size = 0x800, scoped, tag = 'input window, operand 0, single buffered']
    #allocation3 [shape = 's32[1]{0}', space=sflag, size = 0x4, scoped, tag = 'scoped memory for tpu_custom_call.1']
    #allocation4 [shape = 's32[1]{0}', space=sflag, size = 0x4, scoped, tag = 'scoped memory for tpu_custom_call.1']
    #allocation5 [shape = 'u8[4096]{0}', space=vmem, size = 0x1000, scoped, tag = 'input window, operand 1, single buffered']
    #allocation6 [shape = 's32[1]{0}', space=sflag, size = 0x4, scoped, tag = 'scoped memory for tpu_custom_call.1']
    #allocation7 [shape = 'u8[32768]{0}', space=vmem, size = 0x8000, scoped, tag = 'input window, operand 2, single buffered']
    #allocation8 [shape = 'u8[32768]{0}', space=vmem, size = 0x8000, scoped, tag = 'input window, operand 3, single buffered']
    #allocation9 [shape = 's32[1]{0}', space=sflag, size = 0x4, scoped, tag = 'scoped memory for tpu_custom_call.1']
    #allocation10 [shape = 'u8[2048]{0}', space=vmem, size = 0x800, scoped, tag = 'input window, operand 4, single buffered']
    #allocation11 [shape = 'u8[4096]{0}', space=vmem, size = 0x1000, scoped, tag = 'output window, operand 0, single buffered']
    %10 = vsyncpa [#allocation3], 0
    %11 = vsyncpa [#allocation6], 0
    %12 = vsyncpa [#allocation9], 0
    %13 = vsyncpa [#allocation4], 0
    // Predicated region
    $region2: #{tpu_custom_call.1} parent=1 // pred_check
      _
    $region3: #{tpu_custom_call.1} parent=1 // pred_check_branch
      %15 = sbr.rel (0) target = $region5
    $region4: #{tpu_custom_call.1} parent=1 // pred_region
      %17 = vsyncadd [#allocation3], 0
      %s19 = sshll.u32 %s0, 4
      %s20 = int_to_ptr.hbm [resolvable:$true] %s19
      %s21 = sshll.u32 [#allocation2], 4
      %s22 = int_to_ptr.vmem [resolvable:$true] %s21
      %24 = dma.hbm_to_vmem [thread:$0]  %s20, 64, %s22, [#allocation3]
    $region5: #{tpu_custom_call.1} parent=1 // pred_fallthru
      _
    // Predicated region
    $region6: #{tpu_custom_call.1} parent=1 // pred_check
      _
    $region7: #{tpu_custom_call.1} parent=1 // pred_check_branch
      %26 = sbr.rel (0) target = $region9
    $region8: #{tpu_custom_call.1} parent=1 // pred_region
      %28 = vsyncadd [#allocation6], 0
      %s29 = sshll.u32 %s1, 4
      %s30 = int_to_ptr.hbm [resolvable:$true] %s29
      %s31 = sshll.u32 [#allocation5], 4
      %s32 = int_to_ptr.vmem [resolvable:$true] %s31
      %37 = dma.hbm_to_vmem [thread:$0]  %s30, 128, %s32, [#allocation6], 64, 64, 4
    $region9: #{tpu_custom_call.1} parent=1 // pred_fallthru
      _
    // Predicated region
    $region10: #{tpu_custom_call.1} parent=1 // pred_check
      _
    $region11: #{tpu_custom_call.1} parent=1 // pred_check_branch
      %39 = sbr.rel (0) target = $region13
    $region12: #{tpu_custom_call.1} parent=1 // pred_region
      %41 = vsyncadd [#allocation6], 0
      %s42 = sshll.u32 %s2, 4
      %s43 = int_to_ptr.hbm [resolvable:$true] %s42
      %s44 = sshll.u32 [#allocation7], 4
      %s45 = int_to_ptr.vmem [resolvable:$true] %s44
      %50 = dma.hbm_to_vmem [thread:$0]  %s43, 1024, %s45, [#allocation6], 64, 64, 4
    $region13: #{tpu_custom_call.1} parent=1 // pred_fallthru
      _
    // Predicated region
    $region14: #{tpu_custom_call.1} parent=1 // pred_check
      _
    $region15: #{tpu_custom_call.1} parent=1 // pred_check_branch
      %52 = sbr.rel (0) target = $region17
    $region16: #{tpu_custom_call.1} parent=1 // pred_region
      %54 = vsyncadd [#allocation9], 0
      %s55 = sshll.u32 %s3, 4
      %s56 = int_to_ptr.hbm [resolvable:$true] %s55
      %s57 = sshll.u32 [#allocation8], 4
      %s58 = int_to_ptr.vmem [resolvable:$true] %s57
      %63 = dma.hbm_to_vmem [thread:$0]  %s56, 1024, %s58, [#allocation9], 64, 64, 4
    $region17: #{tpu_custom_call.1} parent=1 // pred_fallthru
      _
    // Predicated region
    $region18: #{tpu_custom_call.1} parent=1 // pred_check
      _
    $region19: #{tpu_custom_call.1} parent=1 // pred_check_branch
      %65 = sbr.rel (0) target = $region21
    $region20: #{tpu_custom_call.1} parent=1 // pred_region
      %67 = vsyncadd [#allocation9], 0
      %s69 = sshll.u32 %s4, 4
      %s70 = int_to_ptr.hbm [resolvable:$true] %s69
      %s71 = sshll.u32 [#allocation10], 4
      %s72 = int_to_ptr.vmem [resolvable:$true] %s71
      %74 = dma.hbm_to_vmem [thread:$0]  %s70, 64, %s72, [#allocation9]
    $region21: #{tpu_custom_call.1} parent=1 // pred_fallthru
      _
    // Predicated region
    $region22: #{tpu_custom_call.1} parent=1 // pred_check
      _
    $region23: #{tpu_custom_call.1} parent=1 // pred_check_branch
      %76 = sbr.rel (0) target = $region25
    $region24: #{tpu_custom_call.1} parent=1 // pred_region
      %78 = dma.done [#allocation3], 64
    $region25: #{tpu_custom_call.1} parent=1 // pred_fallthru
      _
    // Predicated region
    $region26: #{tpu_custom_call.1} parent=1 // pred_check
      _
    $region27: #{tpu_custom_call.1} parent=1 // pred_check_branch
      %80 = sbr.rel (0) target = $region29
    $region28: #{tpu_custom_call.1} parent=1 // pred_region
      %82 = dma.done [#allocation6], 128
    $region29: #{tpu_custom_call.1} parent=1 // pred_fallthru
      _
    // Predicated region
    $region30: #{tpu_custom_call.1} parent=1 // pred_check
      _
    $region31: #{tpu_custom_call.1} parent=1 // pred_check_branch
      %84 = sbr.rel (0) target = $region33
    $region32: #{tpu_custom_call.1} parent=1 // pred_region
      %86 = dma.done [#allocation6], 1024
    $region33: #{tpu_custom_call.1} parent=1 // pred_fallthru
      _
    // Predicated region
    $region34: #{tpu_custom_call.1} parent=1 // pred_check
      _
    $region35: #{tpu_custom_call.1} parent=1 // pred_check_branch
      %88 = sbr.rel (0) target = $region37
    $region36: #{tpu_custom_call.1} parent=1 // pred_region
      %90 = dma.done [#allocation9], 1024
    $region37: #{tpu_custom_call.1} parent=1 // pred_fallthru
      _
    // Predicated region
    $region38: #{tpu_custom_call.1} parent=1 // pred_check
      _
    $region39: #{tpu_custom_call.1} parent=1 // pred_check_branch
      %92 = sbr.rel (0) target = $region41
    $region40: #{tpu_custom_call.1} parent=1 // pred_region
      %94 = dma.done [#allocation9], 64
    $region41: #{tpu_custom_call.1} parent=1 // pred_fallthru
      _
    %v96 = vld [vmem:[#allocation2] sm:$0xf]
    %v97 = vld [vmem:[#allocation5] sm:$0xf]
    %v98 = vld [vmem:[#allocation5 + $0x4] sm:$0xf]
    %v99 = vld [vmem:[#allocation10] sm:$0x1]
    %v100 = vperm.slane %v99, 0
    %v103 = vunpack.c.l.b16 %v97
    %v104 = vunpack.c.l.b16 %v98
    %v105 = vpack.c.b16 %v104, %v103
    %vm107 = vcmask 130048
    %v109 = vsel %vm107, %v96, 0
    %111 = vmatpush.bf16.msra.mxu0 0
    %112 = vmatpush.bf16.msra.mxu0 0
    %113 = vmatpush.bf16.msra.mxu0 0
    %114 = vmatpush.bf16.msra.mxu0 0
    %115 = vmatpush.bf16.msra.mxu0 0
    %116 = vmatpush.bf16.msra.mxu0 0
    %117 = vmatpush.bf16.msra.mxu0 0
    %118 = vmatpush.bf16.msra.mxu0 %v105
    %119 = vmatmul.bf16.gmra.mxu0 %v109
    %v120 = vpop.f32.mrf.mxu0
    %v121 = vadd.f32 %v100, %v120
    %v122 = vpop.f32.mrf.mxu0
    %123 = vdwg.mxu0
    %v124 = vmax.f32 %v121, 0.0
    %v125 = vpack.c.bf16 %v124, %v124
    %v126 = vld [vmem:[#allocation7] sm:$0xf]
    %v127 = vld [vmem:[#allocation7 + $0x4] sm:$0xf]
    %v128 = vld [vmem:[#allocation7 + $0x8] sm:$0xf]
    %v129 = vld [vmem:[#allocation7 + $0xc] sm:$0xf]
    %v130 = vld [vmem:[#allocation7 + $0x10] sm:$0xf]
    %v131 = vld [vmem:[#allocation7 + $0x14] sm:$0xf]
    %v132 = vld [vmem:[#allocation7 + $0x18] sm:$0xf]
    %v133 = vld [vmem:[#allocation7 + $0x1c] sm:$0xf]
    %v134 = vld [vmem:[#allocation7 + $0x20] sm:$0xf]
    %v135 = vld [vmem:[#allocation7 + $0x24] sm:$0xf]
    %v136 = vld [vmem:[#allocation7 + $0x28] sm:$0xf]
    %v137 = vld [vmem:[#allocation7 + $0x2c] sm:$0xf]
    %v138 = vld [vmem:[#allocation7 + $0x30] sm:$0xf]
    %v139 = vld [vmem:[#allocation7 + $0x34] sm:$0xf]
    %v140 = vld [vmem:[#allocation7 + $0x38] sm:$0xf]
    %v141 = vld [vmem:[#allocation7 + $0x3c] sm:$0xf]
    %v142 = vld [vmem:[#allocation10 + $0x1] sm:$0x1]
    %v143 = vperm.slane %v142, 0
    %v160 = vunpack.c.l.b16 %v126
    %v161 = vunpack.c.l.b16 %v127
    %v162 = vunpack.c.l.b16 %v128
    %v163 = vunpack.c.l.b16 %v129
    %v164 = vunpack.c.l.b16 %v130
    %v165 = vunpack.c.l.b16 %v131
    %v166 = vunpack.c.l.b16 %v132
    %v167 = vunpack.c.l.b16 %v133
    %v168 = vunpack.c.l.b16 %v134
    %v169 = vunpack.c.l.b16 %v135
    %v170 = vunpack.c.l.b16 %v136
    %v171 = vunpack.c.l.b16 %v137
    %v172 = vunpack.c.l.b16 %v138
    %v173 = vunpack.c.l.b16 %v139
    %v174 = vunpack.c.l.b16 %v140
    %v175 = vunpack.c.l.b16 %v141
    %v176 = vpack.c.b16 %v161, %v160
    %v177 = vpack.c.b16 %v163, %v162
    %v178 = vpack.c.b16 %v165, %v164
    %v179 = vpack.c.b16 %v167, %v166
    %v180 = vpack.c.b16 %v169, %v168
    %v181 = vpack.c.b16 %v171, %v170
    %v182 = vpack.c.b16 %v173, %v172
    %v183 = vpack.c.b16 %v175, %v174
    %192 = vmatpush.bf16.msra.mxu0 %v183
    %193 = vmatpush.bf16.msra.mxu0 %v182
    %194 = vmatpush.bf16.msra.mxu0 %v181
    %195 = vmatpush.bf16.msra.mxu0 %v180
    %196 = vmatpush.bf16.msra.mxu0 %v179
    %197 = vmatpush.bf16.msra.mxu0 %v178
    %198 = vmatpush.bf16.msra.mxu0 %v177
    %199 = vmatpush.bf16.msra.mxu0 %v176
    %200 = vmatmul.bf16.gmra.mxu0 %v125
    %v201 = vpop.f32.mrf.mxu0
    %v202 = vadd.f32 %v143, %v201
    %v203 = vpop.f32.mrf.mxu0
    %204 = vdwg.mxu0
    %v205 = vmax.f32 %v202, 0.0
    %v206 = vpack.c.bf16 %v205, %v205
    %v207 = vld [vmem:[#allocation8] sm:$0xf]
    %v208 = vld [vmem:[#allocation8 + $0x4] sm:$0xf]
    %v209 = vld [vmem:[#allocation8 + $0x8] sm:$0xf]
    %v210 = vld [vmem:[#allocation8 + $0xc] sm:$0xf]
    %v211 = vld [vmem:[#allocation8 + $0x10] sm:$0xf]
    %v212 = vld [vmem:[#allocation8 + $0x14] sm:$0xf]
    %v213 = vld [vmem:[#allocation8 + $0x18] sm:$0xf]
    %v214 = vld [vmem:[#allocation8 + $0x1c] sm:$0xf]
    %v215 = vld [vmem:[#allocation8 + $0x20] sm:$0xf]
    %v216 = vld [vmem:[#allocation8 + $0x24] sm:$0xf]
    %v217 = vld [vmem:[#allocation8 + $0x28] sm:$0xf]
    %v218 = vld [vmem:[#allocation8 + $0x2c] sm:$0xf]
    %v219 = vld [vmem:[#allocation8 + $0x30] sm:$0xf]
    %v220 = vld [vmem:[#allocation8 + $0x34] sm:$0xf]
    %v221 = vld [vmem:[#allocation8 + $0x38] sm:$0xf]
    %v222 = vld [vmem:[#allocation8 + $0x3c] sm:$0xf]
    %v223 = vld [vmem:[#allocation10 + $0x2] sm:$0x1]
    %v224 = vperm.slane %v223, 0
    %v241 = vunpack.c.l.b16 %v207
    %v242 = vunpack.c.l.b16 %v208
    %v243 = vunpack.c.l.b16 %v209
    %v244 = vunpack.c.l.b16 %v210
    %v245 = vunpack.c.l.b16 %v211
    %v246 = vunpack.c.l.b16 %v212
    %v247 = vunpack.c.l.b16 %v213
    %v248 = vunpack.c.l.b16 %v214
    %v249 = vunpack.c.l.b16 %v215
    %v250 = vunpack.c.l.b16 %v216
    %v251 = vunpack.c.l.b16 %v217
    %v252 = vunpack.c.l.b16 %v218
    %v253 = vunpack.c.l.b16 %v219
    %v254 = vunpack.c.l.b16 %v220
    %v255 = vunpack.c.l.b16 %v221
    %v256 = vunpack.c.l.b16 %v222
    %v257 = vpack.c.b16 %v242, %v241
    %v258 = vpack.c.b16 %v244, %v243
    %v259 = vpack.c.b16 %v246, %v245
    %v260 = vpack.c.b16 %v248, %v247
    %v261 = vpack.c.b16 %v250, %v249
    %v262 = vpack.c.b16 %v252, %v251
    %v263 = vpack.c.b16 %v254, %v253
    %v264 = vpack.c.b16 %v256, %v255
    %273 = vmatpush.bf16.msra.mxu0 %v264
    %274 = vmatpush.bf16.msra.mxu0 %v263
    %275 = vmatpush.bf16.msra.mxu0 %v262
    %276 = vmatpush.bf16.msra.mxu0 %v261
    %277 = vmatpush.bf16.msra.mxu0 %v260
    %278 = vmatpush.bf16.msra.mxu0 %v259
    %279 = vmatpush.bf16.msra.mxu0 %v258
    %280 = vmatpush.bf16.msra.mxu0 %v257
    %281 = vmatmul.bf16.gmra.mxu0 %v206
    %v282 = vpop.f32.mrf.mxu0
    %v283 = vadd.f32 %v224, %v282
    %v284 = vpop.f32.mrf.mxu0
    %285 = vdwg.mxu0
    %v286 = vtanh.pop %v283
    %287 = vst [vmem:[#allocation11] sm:$0xff] %v286
    // Predicated region
    $region42: #{tpu_custom_call.1} parent=1 // pred_check
      _
    $region43: #{tpu_custom_call.1} parent=1 // pred_check_branch
      %289 = sbr.rel (0) target = $region45
    $region44: #{tpu_custom_call.1} parent=1 // pred_region
      %291 = vsyncadd [#allocation4], 0
      %s293 = sshll.u32 [#allocation11], 4
      %s294 = int_to_ptr.vmem [resolvable:$true] %s293
      %s295 = sshll.u32 %s5, 4
      %s296 = int_to_ptr.hbm [resolvable:$true] %s295
      %298 = dma.vmem_to_hbm [thread:$0]  %s294, 128, %s296, [#allocation4]
    $region45: #{tpu_custom_call.1} parent=1 // pred_fallthru
      _
    // Predicated region
    $region46: #{tpu_custom_call.1} parent=1 // pred_check
      _
    $region47: #{tpu_custom_call.1} parent=1 // pred_check_branch
      %300 = sbr.rel (0) target = $region49
    $region48: #{tpu_custom_call.1} parent=1 // pred_region
      %302 = dma.done [#allocation4], 128
    $region49: #{tpu_custom_call.1} parent=1 // pred_fallthru
      _
    %303 = vsyncpa [#allocation3], 1
    %304 = vsyncpa [#allocation6], 1
    %305 = vsyncpa [#allocation9], 1
    %306 = vsyncpa [#allocation4], 1

</llo_original>
